<compile_context>
chip_gen: v7x
topology: tpu7x:2x2x1
jax: 0.10.0
libtpu: 0.0.40
codegen_flags: <defaults>
</compile_context>

<pallas_src>
import jax
import jax.numpy as jnp
from jax.experimental import pallas as pl
from jax.experimental.pallas import tpu as pltpu


def _round_up(n: int, m: int) -> int:
    return ((n + m - 1) // m) * m


def _cdiv(a: int, b: int) -> int:
    return (a + b - 1) // b


def simple_model_kernel(params_ref, x_ref, o_ref):
    """Fused (x + 1) -> Linear(3, 1), transposed (lane-dense) layout.

    params_ref: (4,) f32 in SMEM = [w0, w1, w2, sum(w) + bias]
    x_ref:      (3, TB)  — features on sublanes, batch on lanes
    o_ref:      (1, TB)  — lane-dense output row
    """
    w0 = params_ref[0]
    w1 = params_ref[1]
    w2 = params_ref[2]
    c = params_ref[3]          # sum(w) + bias  (folds the "+1" pass)

    x = x_ref[...]             # (3, TB)
    # Pure VPU multiply-add chain; no XLU reduce, no masked stores.
    acc = w0 * x[0:1, :] + w1 * x[1:2, :] + w2 * x[2:3, :] + c
    o_ref[...] = acc.astype(o_ref.dtype)


def simple_model_forward(x, fc_weight, fc_bias, *, tb=128 * 1024,
                         feature_major=False):
    """Forward pass of SimpleModel.

    x:         (B, 3)  (or (3, B) if feature_major=True)
    fc_weight: (1, 3)
    fc_bias:   (1,)
    returns:   (B, 1)

    tb: max tile width in lanes (multiple of 128). Default 128K lanes keeps the
    double-buffered in+out footprint at ~4 MiB — within every generation's
    scoped-VMEM default; raise vmem_limit_bytes if you go past ~512K on v7x or
    ~256K on v5e.
    """
    if feature_major:
        F, B = x.shape
        x_t = x                    # already (3, B): no relayout pass needed
    else:
        B, F = x.shape
        # TODO(synk): if the producer can emit x feature-major (3, B), pass
        # feature_major=True — this transpose is the dominant non-kernel cost.
        x_t = x.T                  # (3, B)
    assert F == 3

    # Fold the elementwise "+1" into the bias constant (SMEM scalars).
    w = fc_weight.reshape(F).astype(jnp.float32)
    c = jnp.sum(w) + fc_bias.reshape(()).astype(jnp.float32)
    params = jnp.concatenate([w, jnp.reshape(c, (1,))])          # (4,)

    # Pad batch only to the next multiple of 128 lanes (<= 127 extra lanes).
    b_pad = _round_up(B, 128)
    if b_pad != B:
        x_t = jnp.pad(x_t, ((0, 0), (0, b_pad - B)))             # (3, b_pad)

    # Tile selection: big tiles, ragged last block allowed, even >=2-step grid
    # when one tile would otherwise cover a large batch (v7x megacore).
    tb_eff = max(128, (int(tb) // 128) * 128)
    tb_eff = min(tb_eff, b_pad)
    if tb_eff == b_pad and b_pad >= 2 * 128:
        tb_eff = _round_up(_cdiv(b_pad, 2), 128)
    grid = (_cdiv(b_pad, tb_eff),)                               # partial last block OK

    out_t = pl.pallas_call(
        simple_model_kernel,
        out_shape=jax.ShapeDtypeStruct((1, b_pad), x.dtype),
        grid=grid,
        in_specs=[
            pl.BlockSpec(memory_space=pltpu.MemorySpace.SMEM),   # params: SMEM scalars
            pl.BlockSpec((F, tb_eff), lambda i: (0, i)),         # x tile: (3, TB)
        ],
        out_specs=pl.BlockSpec((1, tb_eff), lambda i: (0, i)),   # lane-dense row
        compiler_params=pltpu.CompilerParams(
            dimension_semantics=("parallel",),
        ),
    )(params, x_t)

    # Padded tail lanes hold c = sum(w)+bias (not zero); they are sliced off
    # here — do not consume the padded (1, b_pad) buffer directly.
    return out_t[:, :B].T


if __name__ == "__main__":
    key = jax.random.PRNGKey(0)
    kx, kw, kb = jax.random.split(key, 3)

    # Small, module-consistent shapes: batch=8, in_features=3 (Linear(3, 1)).
    B, F = 8, 3
    x = jax.random.normal(kx, (B, F), dtype=jnp.float32)

    # Deterministic parameter init mimicking nn.Linear default:
    # uniform(-1/sqrt(in_features), 1/sqrt(in_features)).
    bound = 1.0 / jnp.sqrt(jnp.float32(F))
    fc_weight = jax.random.uniform(kw, (1, F), jnp.float32, -bound, bound)
    fc_bias = jax.random.uniform(kb, (1,), jnp.float32, -bound, bound)

    # Pure-JAX reference of the same semantics: (x + 1) @ W.T + b.
    ref = (x + 1.0) @ fc_weight.T + fc_bias

    # Default path: (B, 3) input, single tile.
    out = jax.block_until_ready(simple_model_forward(x, fc_weight, fc_bias))
    assert out.shape == (B, 1)
    assert jnp.allclose(out, ref, atol=1e-5, rtol=1e-5)

    # Feature-major producer path: skips the wrapper-side transpose.
    out_fm = jax.block_until_ready(
        simple_model_forward(x.T, fc_weight, fc_bias, feature_major=True))
    assert out_fm.shape == (B, 1)
    assert jnp.allclose(out_fm, ref, atol=1e-5, rtol=1e-5)

    # Multi-tile path with ragged tail: B=300 -> b_pad=384, tb=256 -> even
    # 2-step grid with a partial last block.
    B2 = 300
    x2 = jax.random.normal(kx, (B2, F), dtype=jnp.float32)
    ref2 = (x2 + 1.0) @ fc_weight.T + fc_bias
    out2 = jax.block_until_ready(
        simple_model_forward(x2, fc_weight, fc_bias, tb=256))
    assert out2.shape == (B2, 1)
    assert jnp.allclose(out2, ref2, atol=1e-5, rtol=1e-5)

    print("KERNEL_OK")
</pallas_src>

<mosaic_0001>
module attributes {stable_mosaic.version = 11 : i64} {
  func.func @simple_model_kernel(%arg0: i32, %arg1: memref<4xf32, #tpu.memory_space<smem>>, %arg2: memref<3x128xf32, #tpu.memory_space<vmem>>, %arg3: memref<1x128xf32, #tpu.memory_space<vmem>>) attributes {dimension_semantics = [#tpu.dimension_semantics<parallel>], iteration_bounds = array<i64: 1>, scalar_prefetch = 0 : i64, scratch_operands = 0 : i64, tpu.core_type = #tpu.core_type<tc>, window_params = [{transform_indices = @transform_0, window_bounds = array<i64: 4>}, {transform_indices = @transform_1, window_bounds = array<i64: 3, 128>}, {transform_indices = @transform_2, window_bounds = array<i64: 1, 128>}]} {
    %c0 = arith.constant 0 : index
    %0 = memref.load %arg1[%c0] : memref<4xf32, #tpu.memory_space<smem>>
    %c1 = arith.constant 1 : index
    %1 = memref.load %arg1[%c1] : memref<4xf32, #tpu.memory_space<smem>>
    %c2 = arith.constant 2 : index
    %2 = memref.load %arg1[%c2] : memref<4xf32, #tpu.memory_space<smem>>
    %c3 = arith.constant 3 : index
    %3 = memref.load %arg1[%c3] : memref<4xf32, #tpu.memory_space<smem>>
    %c0_0 = arith.constant 0 : index
    %c0_1 = arith.constant 0 : index
    %4 = vector.load %arg2[%c0_0, %c0_1] : memref<3x128xf32, #tpu.memory_space<vmem>>, vector<3x128xf32>
    %5 = vector.extract_strided_slice %4 {offsets = [0, 0], sizes = [1, 128], strides = [1, 1]} : vector<3x128xf32> to vector<1x128xf32>
    %6 = vector.broadcast %0 : f32 to vector<1x128xf32>
    %7 = arith.mulf %6, %5 : vector<1x128xf32>
    %8 = vector.extract_strided_slice %4 {offsets = [1, 0], sizes = [1, 128], strides = [1, 1]} : vector<3x128xf32> to vector<1x128xf32>
    %9 = vector.broadcast %1 : f32 to vector<1x128xf32>
    %10 = arith.mulf %9, %8 : vector<1x128xf32>
    %11 = arith.addf %7, %10 : vector<1x128xf32>
    %12 = vector.extract_strided_slice %4 {offsets = [2, 0], sizes = [1, 128], strides = [1, 1]} : vector<3x128xf32> to vector<1x128xf32>
    %13 = vector.broadcast %2 : f32 to vector<1x128xf32>
    %14 = arith.mulf %13, %12 : vector<1x128xf32>
    %15 = arith.addf %11, %14 : vector<1x128xf32>
    %16 = vector.broadcast %3 : f32 to vector<1x128xf32>
    %17 = arith.addf %15, %16 : vector<1x128xf32>
    %c0_2 = arith.constant 0 : index
    %c0_3 = arith.constant 0 : index
    %18 = vector.load %arg3[%c0_2, %c0_3] : memref<1x128xf32, #tpu.memory_space<vmem>>, vector<1x128xf32>
    tpu.vector_store %arg3[%c0_2, %c0_3], %17 {strides = array<i32>} : memref<1x128xf32, #tpu.memory_space<vmem>>, vector<1x128xf32>,
    return
  }
  func.func @transform_0(%arg0: i32) -> i32 {
    %c0_i32 = arith.constant 0 : i32
    %c0_i32_0 = arith.constant 0 : i32
    return %c0_i32 : i32
  }
  func.func @transform_1(%arg0: i32) -> (i32, i32) {
    %c0_i32 = arith.constant 0 : i32
    %c0_i32_0 = arith.constant 0 : i32
    return %c0_i32, %arg0 : i32, i32
  }
  func.func @transform_2(%arg0: i32) -> (i32, i32) {
    %c0_i32 = arith.constant 0 : i32
    %c0_i32_0 = arith.constant 0 : i32
    return %c0_i32, %arg0 : i32, i32
  }
}

</mosaic_0001>

<llo_original>
// kernel: tpu_custom_call.1
$region0: #{tpu_custom_call.1}
  #allocation0 [shape = 'u32[]', space=smem, size = 0x4, offset = 0x4, fixed_abs, tag = 'smem constant byte address 0x4 - core index']
  #allocation1 [shape = 'u32[144,128]{1,0:T(1,128)}', space=vmem, size = 0x12000, scoped, tag = 'internal scratch']
  %s0 = inlined_call_operand.hbm [shape: f32[4], index: 0, kind: input, shape index: {}]
  %s1 = inlined_call_operand.hbm [shape: f32[3,128], index: 1, kind: input, shape index: {}]
  %s2 = inlined_call_operand.hbm [shape: f32[1,128], index: 2, kind: output, shape index: {}]
  %s3 = sld [smem:[#allocation0]]
  $region26: #{tpu_custom_call.1} parent=0
    _
  %s5 = ssub.s32 1, %s3
  %s6 = scalar_select 0, %s5, %s3
  $region1: #{tpu_custom_call.1} parent=0
    #allocation2 [shape = 'u8[512]{0}', space=smem, size = 0x200, scoped, tag = 'input window, operand 0, single buffered']
    #allocation3 [shape = 's32[1]{0}', space=sflag, size = 0x4, scoped, tag = 'scoped memory for tpu_custom_call.1']
    #allocation4 [shape = 's32[1]{0}', space=sflag, size = 0x4, scoped, tag = 'scoped memory for tpu_custom_call.1']
    #allocation5 [shape = 's32[1]{0}', space=sflag, size = 0x4, scoped, tag = 'scoped memory for tpu_custom_call.1']
    #allocation6 [shape = 'u8[2048]{0}', space=vmem, size = 0x800, scoped, tag = 'input window, operand 1, single buffered']
    #allocation7 [shape = 'u8[512]{0}', space=vmem, size = 0x400, scoped, tag = 'output window, operand 0, single buffered']
    %7 = vsyncpa [#allocation5], 0
    %8 = vsyncpa [#allocation3], 0
    %9 = vsyncpa [#allocation4], 0
    // Predicated region
    $region2: #{tpu_custom_call.1} parent=1 // pred_check
      _
    $region3: #{tpu_custom_call.1} parent=1 // pred_check_branch
      %11 = sbr.rel (0) target = $region5
    $region4: #{tpu_custom_call.1} parent=1 // pred_region
      %s13 = ssub.s32 16, 16
      %14 = vsyncadd [#allocation5], %s13
      %17 = dma.hbm_to_smem %s0, 16, [#allocation2], [#allocation5]
    $region5: #{tpu_custom_call.1} parent=1 // pred_fallthru
      _
    // Predicated region
    $region6: #{tpu_custom_call.1} parent=1 // pred_check
      _
    $region7: #{tpu_custom_call.1} parent=1 // pred_check_branch
      %19 = sbr.rel (0) target = $region9
    $region8: #{tpu_custom_call.1} parent=1 // pred_region
      %s21 = ssub.s32 64, 64
      %22 = vsyncadd [#allocation3], %s21
      %s24 = sshll.u32 [#allocation6], 4
      %s25 = int_to_ptr.vmem [resolvable:$true] %s24
      %27 = dma.hbm_to_vmem [thread:$0]  %s1, 64, %s25, [#allocation3]
    $region9: #{tpu_custom_call.1} parent=1 // pred_fallthru
      _
    // Predicated region
    $region10: #{tpu_custom_call.1} parent=1 // pred_check
      _
    $region11: #{tpu_custom_call.1} parent=1 // pred_check_branch
      %29 = sbr.rel (0) target = $region13
    $region12: #{tpu_custom_call.1} parent=1 // pred_region
      %30 = dma.done [#allocation5], 16
    $region13: #{tpu_custom_call.1} parent=1 // pred_fallthru
      _
    // Predicated region
    $region14: #{tpu_custom_call.1} parent=1 // pred_check
      _
    $region15: #{tpu_custom_call.1} parent=1 // pred_check_branch
      %32 = sbr.rel (0) target = $region17
    $region16: #{tpu_custom_call.1} parent=1 // pred_region
      %33 = dma.done [#allocation3], 64
    $region17: #{tpu_custom_call.1} parent=1 // pred_fallthru
      _
    %34 = sfence
    %s35 = sld [smem:[#allocation2]]
    %s36 = sld [smem:[#allocation2 + $0x1]]
    %s37 = sld [smem:[#allocation2 + $0x2]]
    %s38 = sld [smem:[#allocation2 + $0x3]]
    %v39 = vld [vmem:[#allocation6] sm:$0x7]
    %v40 = vstv %s35
    %v41 = vmul.f32 %v40, %v39
    %v42 = vstv %s36
    %v43 = vmul.f32 %v42, %v39
    %v45 = vrot.slane %v43, 1
    %v47 = vadd.f32 %v41, %v45
    %v48 = vstv %s37
    %v49 = vmul.f32 %v48, %v39
    %v51 = vrot.slane %v49, 2
    %v53 = vadd.f32 %v47, %v51
    %v54 = vstv %s38
    %v55 = vadd.f32 %v53, %v54
    %56 = vst [vmem:[#allocation7] sm:$0x1] %v55
    // Predicated region
    $region18: #{tpu_custom_call.1} parent=1 // pred_check
      _
    $region19: #{tpu_custom_call.1} parent=1 // pred_check_branch
      %58 = sbr.rel (0) target = $region21
    $region20: #{tpu_custom_call.1} parent=1 // pred_region
      %s60 = ssub.s32 16, 16
      %61 = vsyncadd [#allocation4], %s60
      %s63 = sshll.u32 [#allocation7], 4
      %s64 = int_to_ptr.vmem [resolvable:$true] %s63
      %66 = dma.vmem_to_hbm [thread:$0]  %s64, 16, %s2, [#allocation4]
    $region21: #{tpu_custom_call.1} parent=1 // pred_fallthru
      _
    // Predicated region
    $region22: #{tpu_custom_call.1} parent=1 // pred_check
      _
    $region23: #{tpu_custom_call.1} parent=1 // pred_check_branch
      %68 = sbr.rel (0) target = $region25
    $region24: #{tpu_custom_call.1} parent=1 // pred_region
      %69 = dma.done [#allocation4], 16
    $region25: #{tpu_custom_call.1} parent=1 // pred_fallthru
      _
    %70 = vsyncpa [#allocation3], 1
    %71 = vsyncpa [#allocation4], 1
    %72 = vsyncpa [#allocation5], 1

</llo_original>
